<compile_context>
chip_gen: v5e
topology: v5e:2x2
jax: 0.10.0
libtpu: 0.0.40
codegen_flags: <defaults>
</compile_context>

<pallas_src>
import functools

import jax
import jax.numpy as jnp
from jax.experimental import pallas as pl
from jax.experimental.pallas import tpu as pltpu


# ----------------------------------------------------------------------------
# Tiling helper
# ----------------------------------------------------------------------------
def _pick_tile(n, target):
    """Largest divisor of n that is <= target; keeps the lane dim either a
    multiple of 128 or the full extent."""
    t = min(n, target)
    while n % t:
        t //= 2
    if t != n and t % 128 != 0:
        return n
    return max(t, 1)


# ----------------------------------------------------------------------------
# Reference-side feature projection (separate small pass, bf16 output)
# ----------------------------------------------------------------------------
def _project_kernel(sem_ref, w_ref, out_ref):
    f = jnp.dot(w_ref[...], sem_ref[0].astype(jnp.bfloat16),
                preferred_element_type=jnp.float32)            # (F, T)
    f = f - jnp.mean(f, axis=0, keepdims=True)
    f = f * jax.lax.rsqrt(jnp.sum(f * f, axis=0, keepdims=True) + 1e-5)
    out_ref[0] = f.astype(jnp.bfloat16)


def project_features(sem, w, *, tile_hw=2048):
    """sem: (B, Cs, HW) f32, w: (F, Cs) -> zero-mean L2-normalized (B, F, HW) bf16."""
    B, Cs, HW = sem.shape
    F = w.shape[0]
    t = _pick_tile(HW, tile_hw)
    return pl.pallas_call(
        _project_kernel,
        out_shape=jax.ShapeDtypeStruct((B, F, HW), jnp.bfloat16),
        grid=(B, HW // t),
        in_specs=[
            pl.BlockSpec((1, Cs, t), lambda i, j: (i, 0, j)),
            pl.BlockSpec((F, Cs), lambda i, j: (0, 0)),
        ],
        out_specs=pl.BlockSpec((1, F, t), lambda i, j: (i, 0, j)),
        compiler_params=pltpu.CompilerParams(
            dimension_semantics=("parallel", "parallel")),
    )(sem, w.astype(jnp.bfloat16))


# ----------------------------------------------------------------------------
# netCorr + fused netG: correlation / fixed-max softmax / warp / generator head
# ----------------------------------------------------------------------------
def _corr_warp_g_kernel(in_sem_ref, f_ref_ref, ref_imgo_ref, w_in_ref,
                        gw1s_ref, gw1w_ref, gb1_ref, gw2_ref, gb2_ref,
                        warp_ref, fake_ref,
                        f_in_scr, acc_scr):
    """One (batch, query-tile, key-tile) grid step.

    Layout: channels on sublanes, pixels on lanes.
      in_sem_ref  : (1, Cs,   TQ)  query semantics tile (f32)
      f_ref_ref   : (1, F,    TK)  pre-normalized key features (bf16)
      ref_imgo_ref: (1, Ci+1, TK)  reference image + ones row (bf16)
      w_in_ref    : (F, Cs)        bf16 query projection weights
      gw1s/gw1w/gb1/gw2/gb2        fused netG weights
      warp_ref    : (1, Ci,   TQ)  warp output (written on the last key tile)
      fake_ref    : (1, Cout, TQ)  fake image output (written on the last key tile)
    Scratch (persists across the key-tile grid axis):
      f_in_scr (F, TQ) bf16        cached, *10-scaled query features
      acc_scr  (Ci+1, TQ) f32      value accumulator; last row is sum(p) (denominator)
    """
    k = pl.program_id(2)

    @pl.when(k == 0)
    def _():
        acc_scr[...] = jnp.zeros_like(acc_scr)
        # Query projection computed ONCE per q-tile and cached, with the *10
        # correlation scale folded in (so the (TK,TQ) tile is never rescaled).
        f_in = jnp.dot(w_in_ref[...], in_sem_ref[0].astype(jnp.bfloat16),
                       preferred_element_type=jnp.float32)            # (F, TQ)
        f_in = f_in - jnp.mean(f_in, axis=0, keepdims=True)
        f_in = f_in * jax.lax.rsqrt(jnp.sum(f_in * f_in, 0, keepdims=True) + 1e-5)
        f_in_scr[...] = (10.0 * f_in).astype(jnp.bfloat16)

    # Correlation tile (keys on sublanes, queries on lanes); contract the
    # shared feature axis directly with dot_general -> no transpose copy.
    corr = jax.lax.dot_general(
        f_ref_ref[0], f_in_scr[...],
        dimension_numbers=(((0,), (0,)), ((), ())),
        preferred_element_type=jnp.float32)                            # (TK, TQ)

    # Fixed-max softmax: corr = 10*cosine is guaranteed in [-10, 10] by the L2
    # normalization, so exp(corr - 10) cannot overflow and no running max /
    # alpha rescale bookkeeping is needed.  (Keep exp in f32 for v5e parity;
    # on v6e/v7x the cast could be hoisted before the exp for a bf16 EUP path.)
    p = jnp.exp(corr - 10.0).astype(jnp.bfloat16)                      # (TK, TQ)

    # Value matmul; the appended ones row of ref_imgo accumulates sum(p) as the
    # last accumulator row for free (no cross-sublane reduction per step).
    acc_scr[...] += jnp.dot(ref_imgo_ref[0], p,
                            preferred_element_type=jnp.float32)        # (Ci+1, TQ)

    @pl.when(k == pl.num_programs(2) - 1)
    def _():
        acc = acc_scr[...]
        ci = acc.shape[0] - 1
        warp = acc[:ci, :] / acc[ci:, :]                               # (Ci, TQ)
        warp_ref[0] = warp
        # Fused netG head (per-pixel 2-layer MLP + tanh).  The semantics tile
        # and the warp accumulator are already VMEM-resident, so this avoids a
        # separate kernel launch and an HBM round-trip of warp_out.
        h = jnp.dot(gw1s_ref[...], in_sem_ref[0].astype(jnp.bfloat16),
                    preferred_element_type=jnp.float32)
        h = h + jnp.dot(gw1w_ref[...], warp.astype(jnp.bfloat16),
                        preferred_element_type=jnp.float32)
        h = jnp.maximum(h + gb1_ref[...], 0.0)                         # (Hd, TQ)
        y = jnp.dot(gw2_ref[...], h.astype(jnp.bfloat16),
                    preferred_element_type=jnp.float32) + gb2_ref[...]  # (Cout, TQ)
        fake_ref[0] = jnp.tanh(y)


def corr_warp_generate(in_sem, ref_sem, ref_img,
                       w_corr_in, w_corr_ref,
                       g_w1_sem, g_w1_warp, g_b1, g_w2, g_b2,
                       *, tile_q=1024, tile_k=1024, proj_tile=2048):
    """in_sem/ref_sem: (B, Cs, HW); ref_img: (B, Ci, HW)
    -> (warp (B, Ci, HW), fake_image (B, Cout, HW))."""
    B, Cs, HW = in_sem.shape
    Ci = ref_img.shape[1]
    F = w_corr_in.shape[0]
    Hd = g_w1_sem.shape[0]
    Cout = g_w2.shape[0]
    tq = _pick_tile(HW, tile_q)
    tk = _pick_tile(HW, tile_k)
    # TODO(synk): if HW has no 128-aligned divisor, _pick_tile falls back to a
    # full-extent key tile; pad HW to a multiple of 128 (masking padded keys)
    # for such resolutions instead of materializing a (HW, tq) tile.

    # Reference-side features pre-projected/normalized once (bf16) so the
    # inner (q, k) loop collapses to dot -> exp -> dot.
    f_ref = project_features(ref_sem, w_corr_ref, tile_hw=proj_tile)   # (B, F, HW)

    # Ones row folds the softmax denominator into the value matmul.
    ref_imgo = jnp.concatenate(
        [ref_img, jnp.ones((B, 1, HW), ref_img.dtype)], axis=1).astype(jnp.bfloat16)

    n_q = HW // tq
    cost = pl.CostEstimate(
        flops=int(B * (2 * HW * Cs * F
                       + 2 * HW * HW * (F + Ci + 1)
                       + 2 * HW * Hd * (Cs + Ci + Cout))),
        transcendentals=int(B * (HW * HW + HW * Cout)),
        bytes_accessed=int(B * (4 * HW * Cs                      # semantics (once per q)
                                + 2 * n_q * HW * (F + Ci + 1)    # re-streamed ref side
                                + 4 * HW * (Ci + Cout))          # outputs
                           + 2 * (F * Cs + Hd * (Cs + Ci) + Cout * Hd)),
    )

    bf = jnp.bfloat16
    warp, fake = pl.pallas_call(
        _corr_warp_g_kernel,
        out_shape=(jax.ShapeDtypeStruct((B, Ci, HW), jnp.float32),
                   jax.ShapeDtypeStruct((B, Cout, HW), jnp.float32)),
        grid_spec=pltpu.PrefetchScalarGridSpec(
            num_scalar_prefetch=0,
            grid=(B, HW // tq, HW // tk),
            in_specs=[
                pl.BlockSpec((1, Cs, tq), lambda b, q, k: (b, 0, q)),
                pl.BlockSpec((1, F, tk), lambda b, q, k: (b, 0, k)),
                pl.BlockSpec((1, Ci + 1, tk), lambda b, q, k: (b, 0, k)),
                pl.BlockSpec((F, Cs), lambda b, q, k: (0, 0)),
                pl.BlockSpec((Hd, Cs), lambda b, q, k: (0, 0)),
                pl.BlockSpec((Hd, Ci), lambda b, q, k: (0, 0)),
                pl.BlockSpec((Hd, 1), lambda b, q, k: (0, 0)),
                pl.BlockSpec((Cout, Hd), lambda b, q, k: (0, 0)),
                pl.BlockSpec((Cout, 1), lambda b, q, k: (0, 0)),
            ],
            out_specs=[
                pl.BlockSpec((1, Ci, tq), lambda b, q, k: (b, 0, q)),
                pl.BlockSpec((1, Cout, tq), lambda b, q, k: (b, 0, q)),
            ],
            scratch_shapes=[
                pltpu.VMEM((F, tq), jnp.bfloat16),      # cached scaled query features
                pltpu.VMEM((Ci + 1, tq), jnp.float32),  # accumulator (+ denom row)
            ]),
        compiler_params=pltpu.CompilerParams(
            dimension_semantics=("parallel", "parallel", "arbitrary"),
            # 48 MiB: plenty for 1024x1024 correlation tiles while keeping
            # headroom on v7x's 64 MiB physical VMEM.
            vmem_limit_bytes=48 * 1024 * 1024),
        cost_estimate=cost,
    )(in_sem, f_ref, ref_imgo, w_corr_in.astype(bf),
      g_w1_sem.astype(bf), g_w1_warp.astype(bf), g_b1,
      g_w2.astype(bf), g_b2)
    return warp, fake


# ----------------------------------------------------------------------------
# netG / netD: split-input per-pixel 2-layer MLP (stack of two 1x1 convs)
# ----------------------------------------------------------------------------
def _mlp2_kernel(a_ref, b_ref, w1a_ref, w1b_ref, b1_ref, w2_ref, b2_ref,
                 o_ref, *, act):
    """a_ref (1,Ca,T) + b_ref (1,Cb,T) -> o_ref (1,Cout,T); split first layer
    replaces the host-side channel concat."""
    a = a_ref[0].astype(jnp.bfloat16)
    b = b_ref[0].astype(jnp.bfloat16)
    h = jnp.dot(w1a_ref[...], a, preferred_element_type=jnp.float32)
    h = h + jnp.dot(w1b_ref[...], b, preferred_element_type=jnp.float32)
    h = jnp.maximum(h + b1_ref[...], 0.0)                          # (Hd, T)
    y = jnp.dot(w2_ref[...], h.astype(jnp.bfloat16),
                preferred_element_type=jnp.float32) + b2_ref[...]   # (Cout, T)
    if act == "tanh":
        y = jnp.tanh(y)
    elif act == "lrelu":
        y = jnp.where(y > 0.0, y, 0.2 * y)
    o_ref[0] = y


def pixel_mlp2(a, b, w1a, w1b, b1, w2, b2, *, act, tile_hw=2048):
    """a: (B, Ca, HW), b: (B, Cb, HW) -> (B, Cout, HW); per-pixel MLP."""
    B, Ca, HW = a.shape
    Cb = b.shape[1]
    Hd = w1a.shape[0]
    Cout = w2.shape[0]
    t = _pick_tile(HW, tile_hw)
    kernel = functools.partial(_mlp2_kernel, act=act)

    cost = pl.CostEstimate(
        flops=int(2 * B * HW * Hd * (Ca + Cb + Cout)),
        transcendentals=int(B * HW * Cout) if act == "tanh" else 0,
        bytes_accessed=int(4 * B * HW * (Ca + Cb + Cout)),
    )

    return pl.pallas_call(
        kernel,
        out_shape=jax.ShapeDtypeStruct((B, Cout, HW), jnp.float32),
        grid=(B, HW // t),
        in_specs=[
            pl.BlockSpec((1, Ca, t), lambda i, j: (i, 0, j)),
            pl.BlockSpec((1, Cb, t), lambda i, j: (i, 0, j)),
            pl.BlockSpec((Hd, Ca), lambda i, j: (0, 0)),
            pl.BlockSpec((Hd, Cb), lambda i, j: (0, 0)),
            pl.BlockSpec((Hd, 1), lambda i, j: (0, 0)),
            pl.BlockSpec((Cout, Hd), lambda i, j: (0, 0)),
            pl.BlockSpec((Cout, 1), lambda i, j: (0, 0)),
        ],
        out_specs=pl.BlockSpec((1, Cout, t), lambda i, j: (i, 0, j)),
        compiler_params=pltpu.CompilerParams(
            dimension_semantics=("parallel", "parallel"),
            vmem_limit_bytes=32 * 1024 * 1024),
        cost_estimate=cost,
    )(a, b, w1a.astype(jnp.bfloat16), w1b.astype(jnp.bfloat16), b1,
      w2.astype(jnp.bfloat16), b2)


# ----------------------------------------------------------------------------
# Pure-JAX references (same bf16/f32 mixed precision) for validation
# ----------------------------------------------------------------------------
def _corr_warp_ref(in_sem, ref_sem, ref_img, w_in, w_ref):
    bf, f32 = jnp.bfloat16, jnp.float32
    f_in = jnp.einsum('fc,bcq->bfq', w_in.astype(bf), in_sem.astype(bf),
                      preferred_element_type=f32)
    f_ref = jnp.einsum('fc,bck->bfk', w_ref.astype(bf), ref_sem.astype(bf),
                       preferred_element_type=f32)
    f_in = f_in - f_in.mean(axis=1, keepdims=True)
    f_ref = f_ref - f_ref.mean(axis=1, keepdims=True)
    f_in = f_in * jax.lax.rsqrt((f_in * f_in).sum(1, keepdims=True) + 1e-5)
    f_ref = f_ref * jax.lax.rsqrt((f_ref * f_ref).sum(1, keepdims=True) + 1e-5)
    corr = jnp.einsum('bfk,bfq->bkq', f_ref.astype(bf), f_in.astype(bf),
                      preferred_element_type=f32) * 10.0
    p = jax.nn.softmax(corr, axis=1)
    return jnp.einsum('bck,bkq->bcq', ref_img.astype(bf), p.astype(bf),
                      preferred_element_type=f32)


def _pixel_mlp2_ref(a, b, w1a, w1b, b1, w2, b2, act):
    bf, f32 = jnp.bfloat16, jnp.float32
    h = (jnp.einsum('hc,bcn->bhn', w1a.astype(bf), a.astype(bf),
                    preferred_element_type=f32)
         + jnp.einsum('hc,bcn->bhn', w1b.astype(bf), b.astype(bf),
                      preferred_element_type=f32)
         + b1[None])
    h = jnp.maximum(h, 0.0)
    y = jnp.einsum('oh,bhn->bon', w2.astype(bf), h.astype(bf),
                   preferred_element_type=f32) + b2[None]
    if act == "tanh":
        y = jnp.tanh(y)
    return y


# ----------------------------------------------------------------------------
# Pix2PixModel (inference / discriminate paths)
# ----------------------------------------------------------------------------
class Pix2PixModelPallas:
    def __init__(self, sem_nc=4, img_nc=3, feat_dim=32, hidden=32, seed=0,
                 corr_tile_q=1024, corr_tile_k=1024, mlp_tile=2048):
        self.sem_nc = sem_nc
        self.img_nc = img_nc
        self.corr_tile_q = corr_tile_q
        self.corr_tile_k = corr_tile_k
        self.mlp_tile = mlp_tile
        key = jax.random.PRNGKey(seed)
        ks = jax.random.split(key, 10)
        s = 0.1
        # netCorr feature projections, stored (F, C) so channels contract on MXU.
        self.w_corr_in = s * jax.random.normal(ks[0], (feat_dim, sem_nc), jnp.float32)
        self.w_corr_ref = s * jax.random.normal(ks[1], (feat_dim, sem_nc), jnp.float32)
        # netG: [semantics | warp] -> hidden -> img_nc (tanh).  First layer split.
        self.g_w1_sem = s * jax.random.normal(ks[2], (hidden, sem_nc), jnp.float32)
        self.g_w1_warp = s * jax.random.normal(ks[3], (hidden, img_nc), jnp.float32)
        self.g_b1 = jnp.zeros((hidden, 1), jnp.float32)
        self.g_w2 = s * jax.random.normal(ks[4], (img_nc, hidden), jnp.float32)
        self.g_b2 = jnp.zeros((img_nc, 1), jnp.float32)
        # netD: [semantics | image] -> hidden -> 1 (patch logits).  Split layer 1.
        self.d_w1_sem = s * jax.random.normal(ks[5], (hidden, sem_nc), jnp.float32)
        self.d_w1_img = s * jax.random.normal(ks[6], (hidden, img_nc), jnp.float32)
        self.d_b1 = jnp.zeros((hidden, 1), jnp.float32)
        self.d_w2 = s * jax.random.normal(ks[7], (1, hidden), jnp.float32)
        self.d_b2 = jnp.zeros((1, 1), jnp.float32)

    # -- preprocess_input (non-deepfashion branch of the PyTorch code) --------
    def preprocess_input(self, data):
        label = data['label'][:, :1, :, :].astype(jnp.float32)
        label_ref = data['label_ref'][:, :1, :, :].astype(jnp.float32)
        input_semantics = data['label'].astype(jnp.float32)
        ref_semantics = data['label_ref'].astype(jnp.float32)
        image = data['image'].astype(jnp.float32)
        ref = data['ref'].astype(jnp.float32)
        self_ref = data['self_ref'].astype(jnp.float32)
        return (label, input_semantics, image, self_ref, ref, label_ref,
                ref_semantics)

    @staticmethod
    def _flat(x):
        B, C, H, W = x.shape
        return x.reshape(B, C, H * W)   # NCHW -> (B, C, HW): free reshape

    # -- netCorr + netG (fused single pallas_call) ----------------------------
    def net_corr_g(self, ref_image, input_semantics, ref_semantics):
        B, _, H, W = input_semantics.shape
        warp_flat, fake_flat = corr_warp_generate(
            self._flat(input_semantics), self._flat(ref_semantics),
            self._flat(ref_image),
            self.w_corr_in, self.w_corr_ref,
            self.g_w1_sem, self.g_w1_warp, self.g_b1, self.g_w2, self.g_b2,
            tile_q=self.corr_tile_q, tile_k=self.corr_tile_k,
            proj_tile=self.mlp_tile)
        # TODO(synk): full CoCosNet netCorr also returns multi-scale warp_out /
        # warp_cycle / adaptive features; only the single-scale warp is produced,
        # and netG is a per-pixel MLP stand-in for the SPADE generator.
        return (warp_flat.reshape(B, self.img_nc, H, W),
                fake_flat.reshape(B, self.img_nc, H, W))

    # -- standalone netG (unfused path, kept for API completeness) -----------
    def net_g(self, input_semantics, warp_out):
        B, _, H, W = input_semantics.shape
        fake_flat = pixel_mlp2(
            self._flat(input_semantics), self._flat(warp_out),
            self.g_w1_sem, self.g_w1_warp, self.g_b1, self.g_w2, self.g_b2,
            act="tanh", tile_hw=self.mlp_tile)
        return fake_flat.reshape(B, self.img_nc, H, W)

    # -- netD ------------------------------------------------------------------
    def discriminate(self, input_semantics, fake_image, real_image):
        # No host-side channel/batch concats: the channel concat is fused into
        # the kernel via the split first layer, and fake/real are two calls
        # reusing the same semantics array (halves HBM traffic vs cat+divide).
        B, _, H, W = fake_image.shape
        sem_f = self._flat(input_semantics)
        pred_fake = pixel_mlp2(
            sem_f, self._flat(fake_image),
            self.d_w1_sem, self.d_w1_img, self.d_b1, self.d_w2, self.d_b2,
            act="none", tile_hw=self.mlp_tile)
        pred_real = pixel_mlp2(
            sem_f, self._flat(real_image),
            self.d_w1_sem, self.d_w1_img, self.d_b1, self.d_w2, self.d_b2,
            act="none", tile_hw=self.mlp_tile)
        return pred_fake.reshape(B, 1, H, W), pred_real.reshape(B, 1, H, W)

    @staticmethod
    def divide_pred(pred):
        n = pred.shape[0] // 2
        return pred[:n], pred[n:]

    # -- inference ------------------------------------------------------------
    def inference(self, input_semantics, ref_semantics=None, ref_image=None,
                  self_ref=None, real_image=None):
        warp_out, fake_image = self.net_corr_g(ref_image, input_semantics,
                                               ref_semantics)
        return {'fake_image': fake_image, 'warp_out': warp_out}

    # -- forward --------------------------------------------------------------
    def forward(self, data, mode, GforD=None):
        (input_label, input_semantics, real_image, self_ref, ref_image,
         ref_label, ref_semantics) = self.preprocess_input(data)

        if mode == 'inference':
            out = self.inference(input_semantics, ref_semantics=ref_semantics,
                                 ref_image=ref_image, self_ref=self_ref,
                                 real_image=real_image)
            out['input_semantics'] = input_semantics
            out['ref_semantics'] = ref_semantics
            return out
        elif mode == 'discriminator':
            fake_image = GforD['fake_image']
            pred_fake, pred_real = self.discriminate(input_semantics,
                                                     fake_image, real_image)
            # Hinge GAN loss (opt.gan_mode == 'hinge').
            d_losses = {
                'D_Fake': jnp.mean(jnp.maximum(0.0, 1.0 + pred_fake)),
                'D_real': jnp.mean(jnp.maximum(0.0, 1.0 - pred_real)),
            }
            return d_losses
        elif mode == 'generator':
            # TODO(synk): generator-mode losses require a pretrained VGG19
            # (perceptual / contextual / feature-matching); not reproducible here.
            raise NotImplementedError("generator-mode training losses not implemented")
        else:
            raise ValueError('|mode| is invalid')


# ----------------------------------------------------------------------------
if __name__ == "__main__":
    B, SEM_NC, IMG_NC, H, W = 2, 4, 3, 16, 16
    key = jax.random.PRNGKey(0)
    k = jax.random.split(key, 5)
    data = {
        'label':     jax.random.normal(k[0], (B, SEM_NC, H, W), jnp.float32),
        'label_ref': jax.random.normal(k[1], (B, SEM_NC, H, W), jnp.float32),
        'image':     jax.random.normal(k[2], (B, IMG_NC, H, W), jnp.float32),
        'ref':       jax.random.normal(k[3], (B, IMG_NC, H, W), jnp.float32),
        'self_ref':  jnp.ones((B, 1, 1, 1), jnp.float32),
    }

    # Small tiles so this test exercises the multi-key-tile accumulation path
    # and the tiled MLP / projection grids (production defaults are
    # 1024/2048-wide tiles for real resolutions).
    model = Pix2PixModelPallas(sem_nc=SEM_NC, img_nc=IMG_NC,
                               corr_tile_q=128, corr_tile_k=128, mlp_tile=128)

    # Inference forward (fused netCorr + netG Pallas kernel).
    out = model.forward(data, 'inference')
    fake = jax.block_until_ready(out['fake_image'])
    warp = jax.block_until_ready(out['warp_out'])
    assert fake.shape == (B, IMG_NC, H, W)
    assert warp.shape == (B, IMG_NC, H, W)

    # Discriminator forward (netD Pallas kernel) on the generated image.
    d_losses = model.forward(data, 'discriminator', GforD={'fake_image': fake})
    jax.block_until_ready(d_losses['D_Fake'])
    jax.block_until_ready(d_losses['D_real'])

    # Correctness spot-checks against pure-JAX references (same mixed precision).
    HW = H * W
    in_sem_f = data['label'].reshape(B, SEM_NC, HW)
    ref_sem_f = data['label_ref'].reshape(B, SEM_NC, HW)
    ref_img_f = data['ref'].reshape(B, IMG_NC, HW)

    warp_check = _corr_warp_ref(in_sem_f, ref_sem_f, ref_img_f,
                                model.w_corr_in, model.w_corr_ref)
    err_corr = float(jnp.max(jnp.abs(warp.reshape(B, IMG_NC, HW) - warp_check)))

    fake_check = _pixel_mlp2_ref(in_sem_f, warp.reshape(B, IMG_NC, HW),
                                 model.g_w1_sem, model.g_w1_warp, model.g_b1,
                                 model.g_w2, model.g_b2, act="tanh")
    err_fake = float(jnp.max(jnp.abs(fake.reshape(B, IMG_NC, HW) - fake_check)))

    pred_fake, _ = model.discriminate(data['label'], fake, data['image'])
    d_check = _pixel_mlp2_ref(in_sem_f, fake.reshape(B, IMG_NC, HW),
                              model.d_w1_sem, model.d_w1_img, model.d_b1,
                              model.d_w2, model.d_b2, act="none")
    err_d = float(jnp.max(jnp.abs(pred_fake.reshape(B, 1, HW) - d_check)))

    assert err_corr < 0.1 and err_fake < 0.1 and err_d < 0.1, (err_corr, err_fake, err_d)

    print("KERNEL_OK")
</pallas_src>

<mosaic_0001>
module attributes {stable_mosaic.version = 11 : i64} {
  func.func @_project_kernel(%arg0: i32, %arg1: i32, %arg2: memref<1x4x128xf32, #tpu.memory_space<vmem>>, %arg3: memref<32x4xbf16, #tpu.memory_space<vmem>>, %arg4: memref<1x32x128xbf16, #tpu.memory_space<vmem>>) attributes {dimension_semantics = [#tpu.dimension_semantics<parallel>, #tpu.dimension_semantics<parallel>], iteration_bounds = array<i64: 2, 2>, scalar_prefetch = 0 : i64, scratch_operands = 0 : i64, tpu.core_type = #tpu.core_type<tc>, window_params = [{transform_indices = @transform_0, window_bounds = array<i64: 1, 4, 128>}, {pipeline_mode = #tpu.pipeline_mode<synchronous>, transform_indices = @transform_1, window_bounds = array<i64: 32, 4>}, {transform_indices = @transform_2, window_bounds = array<i64: 1, 32, 128>}]} {
    %c0 = arith.constant 0 : index
    %c0_0 = arith.constant 0 : index
    %0 = vector.load %arg3[%c0, %c0_0] : memref<32x4xbf16, #tpu.memory_space<vmem>>, vector<32x4xbf16>
    %c0_1 = arith.constant 0 : index
    %c0_2 = arith.constant 0 : index
    %c0_3 = arith.constant 0 : index
    %1 = vector.load %arg2[%c0_1, %c0_2, %c0_3] : memref<1x4x128xf32, #tpu.memory_space<vmem>>, vector<1x4x128xf32>
    %2 = vector.shape_cast %1 : vector<1x4x128xf32> to vector<4x128xf32>
    %3 = arith.truncf %2 : vector<4x128xf32> to vector<4x128xbf16>
    %cst = arith.constant dense<0.000000e+00> : vector<32x128xf32>
    %4 = tpu.matmul %0, %3, %cst {dimension_numbers = #tpu.dot_dimension_numbers<[1], [0], [0], [1], [0, 0, 1, 1], [], []>} : vector<32x4xbf16>, vector<4x128xbf16>, vector<32x128xf32> -> vector<32x128xf32>
    %cst_4 = arith.constant dense<0.000000e+00> : vector<128xf32>
    %5 = vector.multi_reduction <add>, %4, %cst_4 [0] : vector<32x128xf32> to vector<128xf32>
    %6 = vector.shape_cast %5 : vector<128xf32> to vector<1x128xf32>
    %cst_5 = arith.constant 3.200000e+01 : f32
    %7 = vector.broadcast %cst_5 : f32 to vector<1x128xf32>
    %8 = arith.divf %6, %7 : vector<1x128xf32>
    %9 = vector.broadcast %8 : vector<1x128xf32> to vector<32x128xf32>
    %10 = arith.subf %4, %9 : vector<32x128xf32>
    %11 = arith.mulf %10, %10 : vector<32x128xf32>
    %cst_6 = arith.constant dense<0.000000e+00> : vector<128xf32>
    %12 = vector.multi_reduction <add>, %11, %cst_6 [0] : vector<32x128xf32> to vector<128xf32>
    %13 = vector.shape_cast %12 : vector<128xf32> to vector<1x128xf32>
    %cst_7 = arith.constant 9.99999974E-6 : f32
    %14 = vector.broadcast %cst_7 : f32 to vector<1x128xf32>
    %15 = arith.addf %13, %14 : vector<1x128xf32>
    %16 = math.rsqrt %15 : vector<1x128xf32>
    %17 = vector.broadcast %16 : vector<1x128xf32> to vector<32x128xf32>
    %18 = arith.mulf %10, %17 : vector<32x128xf32>
    %19 = arith.truncf %18 : vector<32x128xf32> to vector<32x128xbf16>
    %c0_8 = arith.constant 0 : index
    %c0_9 = arith.constant 0 : index
    %c0_10 = arith.constant 0 : index
    %20 = vector.load %arg4[%c0_8, %c0_9, %c0_10] : memref<1x32x128xbf16, #tpu.memory_space<vmem>>, vector<1x32x128xbf16>
    %21 = vector.shape_cast %20 : vector<1x32x128xbf16> to vector<32x128xbf16>
    %22 = vector.shape_cast %19 : vector<32x128xbf16> to vector<1x32x128xbf16>
    tpu.vector_store %arg4[%c0_8, %c0_9, %c0_10], %22 {strides = array<i32>} : memref<1x32x128xbf16, #tpu.memory_space<vmem>>, vector<1x32x128xbf16>,
    return
  }
  func.func @transform_0(%arg0: i32, %arg1: i32) -> (i32, i32, i32) {
    %c0_i32 = arith.constant 0 : i32
    %c0_i32_0 = arith.constant 0 : i32
    return %arg0, %c0_i32, %arg1 : i32, i32, i32
  }
  func.func @transform_1(%arg0: i32, %arg1: i32) -> (i32, i32) {
    %c0_i32 = arith.constant 0 : i32
    %c0_i32_0 = arith.constant 0 : i32
    %c0_i32_1 = arith.constant 0 : i32
    return %c0_i32, %c0_i32_0 : i32, i32
  }
  func.func @transform_2(%arg0: i32, %arg1: i32) -> (i32, i32, i32) {
    %c0_i32 = arith.constant 0 : i32
    %c0_i32_0 = arith.constant 0 : i32
    return %arg0, %c0_i32, %arg1 : i32, i32, i32
  }
}

</mosaic_0001>

<llo_original>
// kernel: tpu_custom_call.1
$region0: #{tpu_custom_call.1}
  #allocation0 [shape = 'u32[]', space=smem, size = 0x4, offset = 0x4, fixed_abs, tag = 'smem constant byte address 0x4 - core index']
  #allocation1 [shape = 'u32[72,128]{1,0:T(1,128)}', space=vmem, size = 0x9000, scoped, tag = 'internal scratch']
  %s0 = inlined_call_operand.vmem [shape: f32[2,4,256], index: 0, kind: input, shape index: {}]
  %s1 = inlined_call_operand.vmem [shape: bf16[32,4], index: 1, kind: input, shape index: {}]
  %s2 = inlined_call_operand.hbm [shape: bf16[2,32,256], index: 2, kind: output, shape index: {}]
  %s3 = sld [smem:[#allocation0]]
  $region41: #{tpu_custom_call.1} parent=0
    _
  %s5 = ssub.s32 1, %s3
  %s6 = scalar_select 0, %s5, %s3
  $region1: #{tpu_custom_call.1} parent=0
    #allocation2 [shape = 'u8[16384]{0}', space=vmem, size = 0x4000, scoped, tag = 'output window, operand 0']
    #allocation3 [shape = 's32[2]{0}', space=sflag, size = 0x8, scoped, tag = 'scoped memory for tpu_custom_call.1']
    %7 = vsyncpa [#allocation3], 0
    %s8 = scalar_lea.sflag [#allocation3], 1
    %9 = vsyncpa %s8, 0
    loop: start=0, step=1, limit=6
    $region2: #{tpu_custom_call.1} parent=1 // loop_pre_header
      _
    $region3: #{tpu_custom_call.1} parent=1 // loop_header
      %s11 = sphi 0, %s15
      %p12 = scmp.ge.s32.totalorder %s11, 6
      %s18 = sphi 0, %s30
      %s19 = sphi 0, %s26
      %s20 = sphi 0, %s18
      %s21 = sphi 0, %s19
      %s22 = sphi 0, %s20
      %s23 = sphi 0, %s21
      %s35 = sphi 0, %s37
      %s38 = sphi 0, %s35
      %s39 = sphi 0, %s38
      %s55 = sphi 0, %s39
      %s59 = sphi 0, %s59
      %s61 = sphi 0, %s59
      %s62 = sphi 0, %s61
      %s76 = sphi 0, %s62
      %s84 = sphi 0, %s86
      %s87 = sphi 0, %s84
      %s88 = sphi 0, %s87
      %s104 = sphi 0, %s88
    $region4: #{tpu_custom_call.1} parent=1 // loop_header_branch
      %14 = sbr.rel (%p12) target = $region8
    $region5: #{tpu_custom_call.1} parent=1 // loop_body
      %s16 = ssub.s32 %s11, 1
      %s17 = ssub.s32 %s11, 2
      %s24 = sadd.s32 1, %s19
      %p25 = scmp.ge.s32.totalorder %s24, 2
      %s26 = scalar_select %p25, 0, %s24
      %s27 = sadd.s32 1, %s18
      %s28 = scalar_select %p25, %s27, %s18
      %p29 = scmp.ge.s32.totalorder %s28, 2
      %s30 = scalar_select %p29, 0, %s28
      %s31 = ssub.s32 %s18, %s30
      %s32 = ssub.s32 %s19, %s26
      %s33 = sor.u32 %s31, %s32
      %p34 = scmp.eq.s32.totalorder %s33, 0
      %s36 = sadd.s32 %s35, 1
      %s37 = scalar_select %p34, %s35, %s36
      %p40 = pneg %p34
      %p41 = scmp.eq.s32.totalorder %s11, 3
      %p42 = por %p40, %p41
      %p43 = scmp.ne.s32.totalorder %s35, %s38
      %p44 = scmp.eq.s32.totalorder %s11, 0
      %p45 = por %p43, %p44
      %p46 = scmp.ne.s32.totalorder %s35, %s38
      %p47 = scmp.eq.s32.totalorder %s16, 3
      %p48 = por %p46, %p47
      %p49 = scmp.ne.s32.totalorder %s38, %s39
      %p50 = scmp.eq.s32.totalorder %s16, 0
      %p51 = por %p49, %p50
      %p52 = scmp.ne.s32.totalorder %s38, %s39
      %p53 = scmp.eq.s32.totalorder %s17, 3
      %p54 = por %p52, %p53
      %p56 = scmp.ne.s32.totalorder %s39, %s55
      %p57 = scmp.eq.s32.totalorder %s17, 0
      %p58 = por %p56, %p57
      %s60 = sadd.s32 %s59, 1
      %p63 = scmp.eq.s32.totalorder %s11, 3
      %p64 = scmp.ne.s32.totalorder %s59, %s61
      %p65 = scmp.eq.s32.totalorder %s11, 0
      %p66 = por %p64, %p65
      %p67 = scmp.ne.s32.totalorder %s59, %s61
      %p68 = scmp.eq.s32.totalorder %s16, 3
      %p69 = por %p67, %p68
      %p70 = scmp.ne.s32.totalorder %s61, %s62
      %p71 = scmp.eq.s32.totalorder %s16, 0
      %p72 = por %p70, %p71
      %p73 = scmp.ne.s32.totalorder %s61, %s62
      %p74 = scmp.eq.s32.totalorder %s17, 3
      %p75 = por %p73, %p74
      %p77 = scmp.ne.s32.totalorder %s62, %s76
      %p78 = scmp.eq.s32.totalorder %s17, 0
      %p79 = por %p77, %p78
      %s80 = ssub.s32 %s18, %s30
      %s81 = ssub.s32 %s19, %s26
      %s82 = sor.u32 %s80, %s81
      %p83 = scmp.eq.s32.totalorder %s82, 0
      %s85 = sadd.s32 %s84, 1
      %s86 = scalar_select %p83, %s84, %s85
      %p89 = pneg %p83
      %p90 = scmp.eq.s32.totalorder %s11, 3
      %p91 = por %p89, %p90
      %p92 = scmp.ne.s32.totalorder %s84, %s87
      %p93 = scmp.eq.s32.totalorder %s11, 0
      %p94 = por %p92, %p93
      %p95 = scmp.ne.s32.totalorder %s84, %s87
      %p96 = scmp.eq.s32.totalorder %s16, 3
      %p97 = por %p95, %p96
      %p98 = scmp.ne.s32.totalorder %s87, %s88
      %p99 = scmp.eq.s32.totalorder %s16, 0
      %p100 = por %p98, %p99
      %p101 = scmp.ne.s32.totalorder %s87, %s88
      %p102 = scmp.eq.s32.totalorder %s17, 3
      %p103 = por %p101, %p102
      %p105 = scmp.ne.s32.totalorder %s88, %s104
      %p106 = scmp.eq.s32.totalorder %s17, 0
      %p107 = por %p105, %p106
      %p108 = scmp.le.s32.totalorder 1, %s11
      %p109 = scmp.lt.s32.totalorder %s11, 5
      %p110 = pnand %p108, %p109
      %p111 = pneg %p110
      // Predicated region
      $region9: #{tpu_custom_call.1} parent=5 // pred_check
        _
      $region10: #{tpu_custom_call.1} parent=5 // pred_check_branch
        %113 = sbr.rel (%p110) target = $region12
      $region11: #{tpu_custom_call.1} parent=5 // pred_region
        %s114 = ssub.s32 %s11, 1
        // Predicated region
        $region13: #{tpu_custom_call.1} parent=11 // pred_check
          %p115 = pneg %p72
        $region14: #{tpu_custom_call.1} parent=11 // pred_check_branch
          %117 = sbr.rel (%p115) target = $region16
        $region15: #{tpu_custom_call.1} parent=11 // pred_region
          _
        $region16: #{tpu_custom_call.1} parent=11 // pred_fallthru
          _
      $region12: #{tpu_custom_call.1} parent=5 // pred_fallthru
        _
      %p118 = scmp.lt.s32.totalorder %s11, 4
      // Predicated region
      $region17: #{tpu_custom_call.1} parent=5 // pred_check
        %p119 = pneg %p118
      $region18: #{tpu_custom_call.1} parent=5 // pred_check_branch
        %121 = sbr.rel (%p119) target = $region20
      $region19: #{tpu_custom_call.1} parent=5 // pred_region
        // Predicated region
        $region21: #{tpu_custom_call.1} parent=19 // pred_check
          %p122 = pneg %p45
        $region22: #{tpu_custom_call.1} parent=19 // pred_check_branch
          %124 = sbr.rel (%p122) target = $region24
        $region23: #{tpu_custom_call.1} parent=19 // pred_region
          %p125 = scmp.lt.s32.totalorder %s18, 1
          %s126 = scalar_select %p125, %s18, 1
          %p127 = scmp.lt.s32.totalorder %s19, 1
          %s128 = scalar_select %p127, %s19, 1
          %s129 = smul.addr %s126, 2
          %s130 = sadd.s32 %s128, %s129
          %s131 = smul.addr %s130, 4
          %s132 = scalar_lea.vmem %s0, %s131
        $region24: #{tpu_custom_call.1} parent=19 // pred_fallthru
          _
      $region20: #{tpu_custom_call.1} parent=5 // pred_fallthru
        _
      %p133 = scmp.le.s32.totalorder 1, %s11
      %p134 = scmp.lt.s32.totalorder %s11, 5
      %p135 = pnand %p133, %p134
      %p136 = pneg %p135
      // Predicated region
      $region25: #{tpu_custom_call.1} parent=5 // pred_check
        _
      $region26: #{tpu_custom_call.1} parent=5 // pred_check_branch
        %138 = sbr.rel (%p135) target = $region28
      $region27: #{tpu_custom_call.1} parent=5 // pred_region
        %s139 = ssub.s32 %s11, 1
        %p140 = scmp.lt.s32.totalorder %s20, 1
        %s141 = scalar_select %p140, %s20, 1
        %p142 = scmp.lt.s32.totalorder %s21, 1
        %s143 = scalar_select %p142, %s21, 1
        %s144 = smul.addr %s141, 2
        %s145 = sadd.s32 %s143, %s144
        %s146 = smul.addr %s145, 4
        %s147 = scalar_lea.vmem %s0, %s146
        %p148 = pneg %p51
        %p149 = pneg %p48
        %p150 = pneg %p72
        %p151 = pneg %p69
        %p152 = pneg %p100
        %p153 = pneg %p97
        %s154 = sand.u32 %s87, 1
        %s155 = scalar_lea.sflag [#allocation3], %s154
        %s156 = sand.u32 %s87, 1
        %s157 = smul.addr %s156, 16
        %s158 = scalar_lea.vmem [#allocation2], %s157
        %p159 = scmp.lt.s32.totalorder %s20, 1
        %s160 = scalar_select %p159, %s20, 1
        %p161 = scmp.lt.s32.totalorder %s21, 1
        %s162 = scalar_select %p161, %s21, 1
        %s163 = smul.addr %s160, 2
        %s164 = sadd.s32 %s162, %s163
        %s165 = smul.addr %s164, 4
        %s166 = scalar_lea.vmem %s0, %s165
        %v168 = vld [vmem:[%s1] sm:$0xf]
        %v169 = vld [vmem:[%s1 + $0x4] sm:$0xf]
        %v170 = vld [vmem:[%s1 + $0x8] sm:$0xf]
        %v171 = vld [vmem:[%s1 + $0xc] sm:$0xf]
        %v172 = vld [vmem:[%s166] sm:$0xf]
        %v173 = vpack.c.bf16 %v172, %v172
        %v178 = vunpack.c.l.b16 %v168
        %v179 = vunpack.c.l.b16 %v169
        %v180 = vunpack.c.l.b16 %v170
        %v181 = vunpack.c.l.b16 %v171
        %v182 = vpack.c.b16 %v179, %v178
        %v183 = vpack.c.b16 %v181, %v180
        %vm184 = vcmask 31744
        %v186 = vsel %vm184, %v182, 0
        %v189 = vsel %vm184, %v183, 0
        %vm191 = vcmask 1041408
        %v193 = vsel %vm191, %v173, 0
        %195 = vmatpush.bf16.msra.mxu0 0
        %196 = vmatpush.bf16.msra.mxu0 0
        %197 = vmatpush.bf16.msra.mxu0 0
        %198 = vmatpush.bf16.msra.mxu0 0
        %199 = vmatpush.bf16.msra.mxu0 0
        %200 = vmatpush.bf16.msra.mxu0 0
        %201 = vmatpush.bf16.msra.mxu0 0
        %202 = vmatpush.bf16.msra.mxu0 %v193
        %203 = vmatmul.bf16.gmra.mxu0 %v186
        %v204 = vpop.f32.mrf.mxu0
        %v205 = vadd.f32 0.0, %v204
        %v206 = vpop.f32.mrf.mxu0
        %v207 = vadd.f32 0.0, %v206
        %208 = vmatmul.bf16.gmra.mxu0 %v189
        %v209 = vpop.f32.mrf.mxu0
        %v210 = vadd.f32 0.0, %v209
        %v211 = vpop.f32.mrf.mxu0
        %v212 = vadd.f32 0.0, %v211
        %213 = vdwg.mxu0
        %v214 = vadd.f32 %v205, %v207
        %v215 = vadd.f32 %v214, %v210
        %v216 = vadd.f32 %v215, %v212
        %v217 = vrot.slane %v216, 4
        %v218 = vadd.f32 %v216, %v217
        %v219 = vrot.slane %v218, 2
        %v220 = vadd.f32 %v218, %v219
        %v221 = vrot.slane %v220, 1
        %v222 = vadd.f32 %v220, %v221
        %v223 = vrcp.pop 32.0
        %v224 = vmul.f32 32.0, %v223
        %v225 = vsub.f32 1.0, %v224
        %v226 = vmul.f32 %v223, %v225
        %v227 = vadd.f32 %v223, %v226
        %vm228 = vweird.f32 %v223
        %v229 = vsel %vm228, %v223, %v227
        %v230 = vmul.f32 %v222, %v229
        %v231 = vsub.f32 %v205, %v230
        %v232 = vsub.f32 %v207, %v230
        %v233 = vsub.f32 %v210, %v230
        %v234 = vsub.f32 %v212, %v230
        %v235 = vmul.f32 %v231, %v231
        %v236 = vmul.f32 %v232, %v232
        %v237 = vmul.f32 %v233, %v233
        %v238 = vmul.f32 %v234, %v234
        %v239 = vadd.f32 %v235, %v236
        %v240 = vadd.f32 %v239, %v237
        %v241 = vadd.f32 %v240, %v238
        %v242 = vrot.slane %v241, 4
        %v243 = vadd.f32 %v241, %v242
        %v244 = vrot.slane %v243, 2
        %v245 = vadd.f32 %v243, %v244
        %v246 = vrot.slane %v245, 1
        %v247 = vadd.f32 %v245, %v246
        %v248 = vadd.f32 %v247, 1e-05
        %v249 = vrsqrt.pop %v248
        %v250 = vmul.f32 %v249, %v248
        %v251 = vmul.f32 %v250, %v249
        %v252 = vmul.f32 0.5, %v251
        %v253 = vsub.f32 1.5, %v252
        %v254 = vmul.f32 %v249, %v253
        %vm255 = vweird.f32 %v248
        %vm256 = vweird.f32 %v249
        %vm257 = vmor %vm255, %vm256
        %v258 = vsel %vm257, %v249, %v254
        %v259 = vmul.f32 %v231, %v258
        %v260 = vmul.f32 %v232, %v258
        %v261 = vmul.f32 %v233, %v258
        %v262 = vmul.f32 %v234, %v258
        %v263 = vpack.c.bf16 %v259, %v259
        %v264 = vpack.c.bf16 %v260, %v260
        %v265 = vpack.c.bf16 %v261, %v261
        %v266 = vpack.c.bf16 %v262, %v262
        %267 = vst [vmem:[%s158] sm:$0xf] %v263
        %268 = vst [vmem:[%s158 + $0x4] sm:$0xf] %v264
        %269 = vst [vmem:[%s158 + $0x8] sm:$0xf] %v265
        %270 = vst [vmem:[%s158 + $0xc] sm:$0xf] %v266
        %s271 = sand.u32 %s87, 1
        %s272 = scalar_lea.sflag [#allocation3], %s271
        %s273 = sand.u32 %s87, 1
        %s274 = smul.addr %s273, 16
        %s275 = scalar_lea.vmem [#allocation2], %s274
        // Predicated region
        $region29: #{tpu_custom_call.1} parent=27 // pred_check
          %p276 = pneg %p97
        $region30: #{tpu_custom_call.1} parent=27 // pred_check_branch
          %278 = sbr.rel (%p276) target = $region32
        $region31: #{tpu_custom_call.1} parent=27 // pred_region
          %280 = vsyncadd %s272, 0
          %s281 = smul.addr %s20, 8
          %s282 = sadd.s32 %s21, %s281
          %s283 = smul.addr %s282, 4
          %s284 = scalar_lea.hbm %s2, %s283
          %s285 = sshll.u32 %s275, 4
          %s286 = int_to_ptr.vmem [resolvable:$true] %s285
          %s287 = sshll.u32 %s284, 4
          %s288 = int_to_ptr.hbm [resolvable:$true] %s287
          %293 = dma.vmem_to_hbm [thread:$0]  %s286, 256, %s288, %s272, 64, 128, 4
        $region32: #{tpu_custom_call.1} parent=27 // pred_fallthru
          _
      $region28: #{tpu_custom_call.1} parent=5 // pred_fallthru
        _
      %p294 = scmp.le.s32.totalorder 2, %s11
      // Predicated region
      $region33: #{tpu_custom_call.1} parent=5 // pred_check
        %p295 = pneg %p294
      $region34: #{tpu_custom_call.1} parent=5 // pred_check_branch
        %297 = sbr.rel (%p295) target = $region36
      $region35: #{tpu_custom_call.1} parent=5 // pred_region
        %s298 = ssub.s32 %s11, 2
        // Predicated region
        $region37: #{tpu_custom_call.1} parent=35 // pred_check
          %p299 = pneg %p103
        $region38: #{tpu_custom_call.1} parent=35 // pred_check_branch
          %301 = sbr.rel (%p299) target = $region40
        $region39: #{tpu_custom_call.1} parent=35 // pred_region
          %s302 = sand.u32 %s88, 1
          %s303 = scalar_lea.sflag [#allocation3], %s302
          %s304 = sand.u32 %s88, 1
          %s305 = smul.addr %s304, 16
          %s306 = scalar_lea.vmem [#allocation2], %s305
          %308 = dma.done %s303, 256
        $region40: #{tpu_custom_call.1} parent=35 // pred_fallthru
          _
      $region36: #{tpu_custom_call.1} parent=5 // pred_fallthru
        _
    $region6: #{tpu_custom_call.1} parent=1 // loop_footer
      %s15 = sadd.s32 1, %s11
    $region7: #{tpu_custom_call.1} parent=1 // loop_footer_branch
      %10 = sbr.rel target = $region3
    $region8: #{tpu_custom_call.1} parent=1 // loop_exit
      _
    %309 = vsyncpa [#allocation3], 1
    %s310 = scalar_lea.sflag [#allocation3], 1
    %311 = vsyncpa %s310, 1

</llo_original>
